<compile_context>
chip_gen: v6e
topology: v6e:2x2x1
jax: 0.10.0
libtpu: 0.0.40
codegen_flags: <defaults>
</compile_context>

<pallas_src>
import functools

import jax
import jax.numpy as jnp
from jax import lax
from jax.experimental import pallas as pl
from jax.experimental.pallas import tpu as pltpu


_LANE, _SUB = 128, 8


def _round_up(x, m):
    return ((x + m - 1) // m) * m


def _ce_tile_kernel(x_ref, w_ref, b_ref, tgt_ref, loss_ref, *, tile_b, batch_true):
    # x_ref:    [TB, D]  f32   (streamed per tile, double-buffered by Pallas)
    # w_ref:    [D,  K]  bf16  (resident across tiles: index_map -> (0, 0))
    # b_ref:    [1,  K]  f32   (resident)
    # tgt_ref:  [TB, 1]  int32 (per tile; tiny DMA)
    # loss_ref: [TB, 1]  f32   (per-example loss; invalid rows -> 0)
    i = pl.program_id(0)

    # In-kernel bf16 cast keeps the HBM stream at native f32 (no wrapper pre-pass)
    # while the MXU runs bf16 x bf16 -> f32 accumulation.
    x = x_ref[...].astype(jnp.bfloat16)
    logits = jnp.dot(x, w_ref[...], preferred_element_type=jnp.float32) + b_ref[...]

    tb, k = logits.shape

    # Numerically stable log-softmax / cross-entropy (matches nn.CrossEntropyLoss).
    m = jnp.max(logits, axis=-1, keepdims=True)              # [TB, 1]
    z = logits - m                                            # [TB, K]
    lse = jnp.log(jnp.sum(jnp.exp(z), axis=-1, keepdims=True))

    col_ids = lax.broadcasted_iota(jnp.int32, (tb, k), dimension=1)
    z_target = jnp.sum(
        jnp.where(col_ids == tgt_ref[...], z, jnp.float32(0.0)),
        axis=-1, keepdims=True)                               # [TB, 1]

    per_example = lse - z_target                              # [TB, 1]

    # Ragged last tile: rows >= batch_true hold garbage x / garbage targets.  The
    # select below discards them (and the untaken branch never propagates NaN); they
    # are also outside the (B, 1) output array, so nothing garbage is written back.
    row_ids = lax.broadcasted_iota(jnp.int32, (tb, 1), dimension=0)
    valid_row = (i * tile_b + row_ids) < batch_true
    loss_ref[...] = jnp.where(valid_row, per_example, jnp.float32(0.0))


def _choose_tile_b(B, D, K, tile_b_cap):
    """Derive the batch tile and VMEM limit from the generation's VMEM capacity."""
    k_vmem = _round_up(max(K, 1), _LANE)  # class dim is lane-padded inside VMEM
    try:
        vmem_cap = int(pltpu.get_tpu_info().vmem_capacity_bytes)
    except Exception:
        vmem_cap = 64 * 1024 * 1024       # conservative: v7x per-TensorCore VMEM

    # ~48 MiB on v7x (64 MiB physical), ~96 MiB on v5e/v6e (128 MiB physical).
    vmem_limit = int(min(vmem_cap * 3 // 4, 100 * 1024 * 1024))
    budget = int(vmem_limit * 0.8)

    # Resident (tb-independent) footprint: W (bf16) + bias, double-buffered by Pallas.
    resident = 2 * D * k_vmem * 2 + 2 * _SUB * k_vmem * 4
    # Per-batch-row footprint: double-buffered f32 x block, in-kernel bf16 copy,
    # lane-padded target/loss blocks, and a few [tb, K] f32 temporaries.
    per_row = (2 * D * 4) + (D * 2) + (2 * _LANE * 4 * 2) + (6 * k_vmem * 4)

    tb = max(_SUB, (budget - resident) // per_row)
    tb = min(int(tb), int(tile_b_cap), _round_up(B, _SUB))
    tb = max(_SUB, (tb // _SUB) * _SUB)

    # v7x megacore: make sure the "parallel" batch axis has >= 2 steps when B allows.
    if B >= 2 * _SUB and -(-B // tb) < 2:
        tb = _round_up(-(-B // 2), _SUB)
    return tb, vmem_limit


def classifier_trainer_forward(x_nchw, target, w, b, *, tile_b=512):
    """Equivalent of ClassifierTrainer.forward((input, target)) with a linear model."""
    B = x_nchw.shape[0]
    D = 1
    for s in x_nchw.shape[1:]:
        D *= s
    K = w.shape[1]

    # No padding / casting pre-pass on the big stream: reshape of contiguous NCHW is
    # free and the f32 activations are consumed directly by the kernel.
    x2d = x_nchw.reshape(B, D)
    tgt = target.astype(jnp.int32).reshape(B, 1)
    w_bf = w.astype(jnp.bfloat16)                 # tiny, one-off parameter cast
    b_f32 = b.astype(jnp.float32).reshape(1, K)

    tb, vmem_limit = _choose_tile_b(B, D, K, tile_b)
    num_tiles = pl.cdiv(B, tb)

    kernel = functools.partial(_ce_tile_kernel, tile_b=tb, batch_true=B)

    per_example = pl.pallas_call(
        kernel,
        out_shape=jax.ShapeDtypeStruct((B, 1), jnp.float32),
        grid=(num_tiles,),
        in_specs=[
            pl.BlockSpec((tb, D), lambda i: (i, 0)),   # x: streamed per tile (f32)
            pl.BlockSpec((D, K), lambda i: (0, 0)),    # W: resident across tiles
            pl.BlockSpec((1, K), lambda i: (0, 0)),    # bias: resident
            pl.BlockSpec((tb, 1), lambda i: (i, 0)),   # targets per tile
        ],
        out_specs=pl.BlockSpec((tb, 1), lambda i: (i, 0)),
        compiler_params=pltpu.CompilerParams(
            dimension_semantics=("parallel",),
            vmem_limit_bytes=vmem_limit,
        ),
    )(x2d, w_bf, b_f32, tgt)

    # Final mean over the true batch size (all B output rows are valid per-example
    # losses; out-of-bounds rows of the last tile were never written back).
    return jnp.sum(per_example) / jnp.float32(B)


def _reference_loss(x_nchw, target, w, b):
    # Reference uses the same bf16-rounded activations/weights as the kernel,
    # with f32 accumulation, so it matches the kernel's numerics.
    B = x_nchw.shape[0]
    x32 = x_nchw.reshape(B, -1).astype(jnp.bfloat16).astype(jnp.float32)
    w32 = w.astype(jnp.bfloat16).astype(jnp.float32)
    logits = jnp.dot(x32, w32, preferred_element_type=jnp.float32) + b
    logp = jax.nn.log_softmax(logits, axis=-1)
    return -jnp.mean(logp[jnp.arange(B), target])


if __name__ == "__main__":
    key = jax.random.PRNGKey(0)
    k_x, k_t, k_w, k_b = jax.random.split(key, 4)

    # Small shapes consistent with an image-classifier forward: NCHW input.
    B, C, H, W = 2, 4, 16, 16
    D = C * H * W
    K = 16  # number of classes

    x = jax.random.normal(k_x, (B, C, H, W), dtype=jnp.float32)
    target = jax.random.randint(k_t, (B,), 0, K, dtype=jnp.int32)

    # Deterministic parameter init for the synthetic linear "model".
    w = jax.random.normal(k_w, (D, K), dtype=jnp.float32) * (1.0 / (D ** 0.5))
    b = jax.random.normal(k_b, (K,), dtype=jnp.float32) * 0.01

    loss = classifier_trainer_forward(x, target, w, b)
    loss = jax.block_until_ready(loss)

    ref = _reference_loss(x, target, w, b)
    assert jnp.allclose(loss, ref, rtol=1e-3, atol=1e-3), (loss, ref)

    print("KERNEL_OK")
</pallas_src>

<mosaic_0001>
module attributes {stable_mosaic.version = 11 : i64} {
  func.func @_ce_tile_kernel(%arg0: i32, %arg1: memref<8x1024xf32, #tpu.memory_space<vmem>>, %arg2: memref<1024x16xbf16, #tpu.memory_space<vmem>>, %arg3: memref<1x16xf32, #tpu.memory_space<vmem>>, %arg4: memref<8x1xi32, #tpu.memory_space<vmem>>, %arg5: memref<8x1xf32, #tpu.memory_space<vmem>>) attributes {dimension_semantics = [#tpu.dimension_semantics<parallel>], iteration_bounds = array<i64: 1>, scalar_prefetch = 0 : i64, scratch_operands = 0 : i64, tpu.core_type = #tpu.core_type<tc>, window_params = [{transform_indices = @transform_0, window_bounds = array<i64: 8, 1024>}, {pipeline_mode = #tpu.pipeline_mode<synchronous>, transform_indices = @transform_1, window_bounds = array<i64: 1024, 16>}, {pipeline_mode = #tpu.pipeline_mode<synchronous>, transform_indices = @transform_2, window_bounds = array<i64: 1, 16>}, {transform_indices = @transform_3, window_bounds = array<i64: 8, 1>}, {transform_indices = @transform_4, window_bounds = array<i64: 8, 1>}]} {
    %c0 = arith.constant 0 : index
    %c0_0 = arith.constant 0 : index
    %0 = vector.load %arg1[%c0, %c0_0] : memref<8x1024xf32, #tpu.memory_space<vmem>>, vector<8x1024xf32>
    %1 = arith.truncf %0 : vector<8x1024xf32> to vector<8x1024xbf16>
    %c0_1 = arith.constant 0 : index
    %c0_2 = arith.constant 0 : index
    %2 = vector.load %arg2[%c0_1, %c0_2] : memref<1024x16xbf16, #tpu.memory_space<vmem>>, vector<1024x16xbf16>
    %cst = arith.constant dense<0.000000e+00> : vector<8x16xf32>
    %3 = tpu.matmul %1, %2, %cst {dimension_numbers = #tpu.dot_dimension_numbers<[1], [0], [0], [1], [0, 0, 1, 1], [], []>} : vector<8x1024xbf16>, vector<1024x16xbf16>, vector<8x16xf32> -> vector<8x16xf32>
    %c0_3 = arith.constant 0 : index
    %c0_4 = arith.constant 0 : index
    %4 = vector.load %arg3[%c0_3, %c0_4] : memref<1x16xf32, #tpu.memory_space<vmem>>, vector<1x16xf32>
    %5 = vector.broadcast %4 : vector<1x16xf32> to vector<8x16xf32>
    %6 = arith.addf %3, %5 : vector<8x16xf32>
    %cst_5 = arith.constant dense<0xFF800000> : vector<8xf32>
    %7 = vector.multi_reduction <maximumf>, %6, %cst_5 [1] : vector<8x16xf32> to vector<8xf32>
    %8 = vector.shape_cast %7 : vector<8xf32> to vector<8x1xf32>
    %9 = vector.broadcast %8 : vector<8x1xf32> to vector<8x16xf32>
    %10 = arith.subf %6, %9 : vector<8x16xf32>
    %11 = math.exp %10 : vector<8x16xf32>
    %cst_6 = arith.constant dense<0.000000e+00> : vector<8xf32>
    %12 = vector.multi_reduction <add>, %11, %cst_6 [1] : vector<8x16xf32> to vector<8xf32>
    %13 = vector.shape_cast %12 : vector<8xf32> to vector<8x1xf32>
    %14 = math.log %13 : vector<8x1xf32>
    %15 = tpu.iota {dimensions = array<i32: 1>} : vector<8x16xi32>
    %c0_7 = arith.constant 0 : index
    %c0_8 = arith.constant 0 : index
    %16 = vector.load %arg4[%c0_7, %c0_8] : memref<8x1xi32, #tpu.memory_space<vmem>>, vector<8x1xi32>
    %17 = vector.broadcast %16 : vector<8x1xi32> to vector<8x16xi32>
    %18 = arith.cmpi eq, %15, %17 : vector<8x16xi32>
    %cst_9 = arith.constant 0.000000e+00 : f32
    %19 = vector.broadcast %cst_9 : f32 to vector<8x16xf32>
    %20 = arith.select %18, %10, %19 : vector<8x16xi1>, vector<8x16xf32>
    %cst_10 = arith.constant dense<0.000000e+00> : vector<8xf32>
    %21 = vector.multi_reduction <add>, %20, %cst_10 [1] : vector<8x16xf32> to vector<8xf32>
    %22 = vector.shape_cast %21 : vector<8xf32> to vector<8x1xf32>
    %23 = arith.subf %14, %22 : vector<8x1xf32>
    %24 = tpu.iota {dimensions = array<i32: 0>} : vector<8x1xi32>
    %c8_i32 = arith.constant 8 : i32
    %25 = arith.muli %arg0, %c8_i32 : i32
    %26 = vector.broadcast %25 : i32 to vector<8x1xi32>
    %27 = arith.addi %26, %24 : vector<8x1xi32>
    %c2_i32 = arith.constant 2 : i32
    %28 = vector.broadcast %c2_i32 : i32 to vector<8x1xi32>
    %29 = arith.cmpi slt, %27, %28 : vector<8x1xi32>
    %cst_11 = arith.constant 0.000000e+00 : f32
    %30 = vector.broadcast %cst_11 : f32 to vector<8x1xf32>
    %31 = arith.select %29, %23, %30 : vector<8x1xi1>, vector<8x1xf32>
    %c0_12 = arith.constant 0 : index
    %c0_13 = arith.constant 0 : index
    %32 = vector.load %arg5[%c0_12, %c0_13] : memref<8x1xf32, #tpu.memory_space<vmem>>, vector<8x1xf32>
    tpu.vector_store %arg5[%c0_12, %c0_13], %31 {strides = array<i32>} : memref<8x1xf32, #tpu.memory_space<vmem>>, vector<8x1xf32>,
    return
  }
  func.func @transform_0(%arg0: i32) -> (i32, i32) {
    %c0_i32 = arith.constant 0 : i32
    %c0_i32_0 = arith.constant 0 : i32
    return %arg0, %c0_i32 : i32, i32
  }
  func.func @transform_1(%arg0: i32) -> (i32, i32) {
    %c0_i32 = arith.constant 0 : i32
    %c0_i32_0 = arith.constant 0 : i32
    %c0_i32_1 = arith.constant 0 : i32
    return %c0_i32, %c0_i32_0 : i32, i32
  }
  func.func @transform_2(%arg0: i32) -> (i32, i32) {
    %c0_i32 = arith.constant 0 : i32
    %c0_i32_0 = arith.constant 0 : i32
    %c0_i32_1 = arith.constant 0 : i32
    return %c0_i32, %c0_i32_0 : i32, i32
  }
  func.func @transform_3(%arg0: i32) -> (i32, i32) {
    %c0_i32 = arith.constant 0 : i32
    %c0_i32_0 = arith.constant 0 : i32
    return %arg0, %c0_i32 : i32, i32
  }
  func.func @transform_4(%arg0: i32) -> (i32, i32) {
    %c0_i32 = arith.constant 0 : i32
    %c0_i32_0 = arith.constant 0 : i32
    return %arg0, %c0_i32 : i32, i32
  }
}

</mosaic_0001>

<llo_original>
// kernel: tpu_custom_call.1
$region0: #{tpu_custom_call.1}
  #allocation0 [shape = 'u32[]', space=smem, size = 0x4, offset = 0x4, fixed_abs, tag = 'smem constant byte address 0x4 - core index']
  #allocation1 [shape = 'u32[144,128]{1,0:T(1,128)}', space=vmem, size = 0x12000, scoped, tag = 'internal scratch']
  %s0 = inlined_call_operand.vmem [shape: f32[2,1024], index: 0, kind: input, shape index: {}]
  %s1 = inlined_call_operand.vmem [shape: bf16[1024,16], index: 1, kind: input, shape index: {}]
  %s2 = inlined_call_operand.vmem [shape: f32[1,16], index: 2, kind: input, shape index: {}]
  %s3 = inlined_call_operand.vmem [shape: s32[2,1], index: 3, kind: input, shape index: {}]
  %s4 = inlined_call_operand.vmem [shape: f32[2,1], index: 4, kind: output, shape index: {}]
  %s5 = sld [smem:[#allocation0]]
  $region56: #{tpu_custom_call.1} parent=0
    _
  %s7 = ssub.s32 1, %s5
  %s8 = scalar_select 0, %s7, %s5
  $region1: #{tpu_custom_call.1} parent=0
    #allocation2 [shape = 'u8[4096]{0}', space=vmem, size = 0x1000, scoped, tag = 'output window, operand 0, single buffered']
    // Predicated region
    $region2: #{tpu_custom_call.1} parent=1 // pred_check
      _
    $region3: #{tpu_custom_call.1} parent=1 // pred_check_branch
      %10 = sbr.rel (0) target = $region5
    $region4: #{tpu_custom_call.1} parent=1 // pred_region
      _
    $region5: #{tpu_custom_call.1} parent=1 // pred_fallthru
      _
    // Predicated region
    $region6: #{tpu_custom_call.1} parent=1 // pred_check
      _
    $region7: #{tpu_custom_call.1} parent=1 // pred_check_branch
      %12 = sbr.rel (0) target = $region9
    $region8: #{tpu_custom_call.1} parent=1 // pred_region
      _
    $region9: #{tpu_custom_call.1} parent=1 // pred_fallthru
      _
    // Predicated region
    $region10: #{tpu_custom_call.1} parent=1 // pred_check
      _
    $region11: #{tpu_custom_call.1} parent=1 // pred_check_branch
      %14 = sbr.rel (0) target = $region13
    $region12: #{tpu_custom_call.1} parent=1 // pred_region
      _
    $region13: #{tpu_custom_call.1} parent=1 // pred_fallthru
      _
    // Predicated region
    $region14: #{tpu_custom_call.1} parent=1 // pred_check
      _
    $region15: #{tpu_custom_call.1} parent=1 // pred_check_branch
      %16 = sbr.rel (0) target = $region17
    $region16: #{tpu_custom_call.1} parent=1 // pred_region
      _
    $region17: #{tpu_custom_call.1} parent=1 // pred_fallthru
      _
    %v18 = vld [vmem:[%s0] sm:$0xff]
    %v19 = vld [vmem:[%s0 + $0x8] sm:$0xff]
    %v20 = vld [vmem:[%s0 + $0x10] sm:$0xff]
    %v21 = vld [vmem:[%s0 + $0x18] sm:$0xff]
    %v22 = vld [vmem:[%s0 + $0x20] sm:$0xff]
    %v23 = vld [vmem:[%s0 + $0x28] sm:$0xff]
    %v24 = vld [vmem:[%s0 + $0x30] sm:$0xff]
    %v25 = vld [vmem:[%s0 + $0x38] sm:$0xff]
    %v34 = vcombine.low %v18, %v20
    %v35 = vcombine.high %v18, %v20
    %v36 = vcombine.low %v22, %v24
    %v37 = vcombine.high %v22, %v24
    %v39 = vunpack.c.l.s4 1983009808
    %v40 = vunpack.c.0.s8 %v39
    %v41 = vlaneseq
    %v42 = vshrl.u32 %v41, 7
    %v43 = vsub.s32 %v40, %v42
    %v44 = vrot.slane %v34, %v43
    %v46 = vunpack.c.l.s4 1983009808
    %v47 = vunpack.c.0.s8 %v46
    %v48 = vlaneseq
    %v49 = vshrl.u32 %v48, 7
    %v50 = vsub.s32 %v47, %v49
    %v51 = vrot.slane %v35, %v50
    %v53 = vunpack.c.l.s4 1983009808
    %v54 = vunpack.c.0.s8 %v53
    %v55 = vlaneseq
    %v56 = vshrl.u32 %v55, 7
    %v57 = vsub.s32 %v54, %v56
    %v58 = vrot.slane %v36, %v57
    %v60 = vunpack.c.l.s4 1983009808
    %v61 = vunpack.c.0.s8 %v60
    %v62 = vlaneseq
    %v63 = vshrl.u32 %v62, 7
    %v64 = vsub.s32 %v61, %v63
    %v65 = vrot.slane %v37, %v64
    %v66 = vcombine.low %v44, %v58
    %v67 = vcombine.high %v44, %v58
    %v68 = vcombine.low %v51, %v65
    %v69 = vcombine.high %v51, %v65
    %v70 = vcombine.low %v19, %v21
    %v71 = vcombine.high %v19, %v21
    %v72 = vcombine.low %v23, %v25
    %v73 = vcombine.high %v23, %v25
    %v75 = vunpack.c.l.s4 1983009808
    %v76 = vunpack.c.0.s8 %v75
    %v77 = vlaneseq
    %v78 = vshrl.u32 %v77, 7
    %v79 = vsub.s32 %v76, %v78
    %v80 = vrot.slane %v70, %v79
    %v82 = vunpack.c.l.s4 1983009808
    %v83 = vunpack.c.0.s8 %v82
    %v84 = vlaneseq
    %v85 = vshrl.u32 %v84, 7
    %v86 = vsub.s32 %v83, %v85
    %v87 = vrot.slane %v71, %v86
    %v89 = vunpack.c.l.s4 1983009808
    %v90 = vunpack.c.0.s8 %v89
    %v91 = vlaneseq
    %v92 = vshrl.u32 %v91, 7
    %v93 = vsub.s32 %v90, %v92
    %v94 = vrot.slane %v72, %v93
    %v96 = vunpack.c.l.s4 1983009808
    %v97 = vunpack.c.0.s8 %v96
    %v98 = vlaneseq
    %v99 = vshrl.u32 %v98, 7
    %v100 = vsub.s32 %v97, %v99
    %v101 = vrot.slane %v73, %v100
    %v102 = vcombine.low %v80, %v94
    %v103 = vcombine.high %v80, %v94
    %v104 = vcombine.low %v87, %v101
    %v105 = vcombine.high %v87, %v101
    %v114 = vpack.c.bf16 %v66, %v66
    %v115 = vpack.c.bf16 %v67, %v67
    %v116 = vpack.c.bf16 %v68, %v68
    %v117 = vpack.c.bf16 %v69, %v69
    %v118 = vpack.c.bf16 %v102, %v102
    %v119 = vpack.c.bf16 %v103, %v103
    %v120 = vpack.c.bf16 %v104, %v104
    %v121 = vpack.c.bf16 %v105, %v105
    %v122 = vld [vmem:[%s1] sm:$0xf]
    %v123 = vld [vmem:[%s1 + $0x4] sm:$0xf]
    %v124 = vld [vmem:[%s1 + $0x8] sm:$0xf]
    %v125 = vld [vmem:[%s1 + $0xc] sm:$0xf]
    %v126 = vld [vmem:[%s1 + $0x10] sm:$0xf]
    %v127 = vld [vmem:[%s1 + $0x14] sm:$0xf]
    %v128 = vld [vmem:[%s1 + $0x18] sm:$0xf]
    %v129 = vld [vmem:[%s1 + $0x1c] sm:$0xf]
    %v130 = vld [vmem:[%s1 + $0x20] sm:$0xf]
    %v131 = vld [vmem:[%s1 + $0x24] sm:$0xf]
    %v132 = vld [vmem:[%s1 + $0x28] sm:$0xf]
    %v133 = vld [vmem:[%s1 + $0x2c] sm:$0xf]
    %v134 = vld [vmem:[%s1 + $0x30] sm:$0xf]
    %v135 = vld [vmem:[%s1 + $0x34] sm:$0xf]
    %v136 = vld [vmem:[%s1 + $0x38] sm:$0xf]
    %v137 = vld [vmem:[%s1 + $0x3c] sm:$0xf]
    %v138 = vld [vmem:[%s1 + $0x40] sm:$0xf]
    %v139 = vld [vmem:[%s1 + $0x44] sm:$0xf]
    %v140 = vld [vmem:[%s1 + $0x48] sm:$0xf]
    %v141 = vld [vmem:[%s1 + $0x4c] sm:$0xf]
    %v142 = vld [vmem:[%s1 + $0x50] sm:$0xf]
    %v143 = vld [vmem:[%s1 + $0x54] sm:$0xf]
    %v144 = vld [vmem:[%s1 + $0x58] sm:$0xf]
    %v145 = vld [vmem:[%s1 + $0x5c] sm:$0xf]
    %v146 = vld [vmem:[%s1 + $0x60] sm:$0xf]
    %v147 = vld [vmem:[%s1 + $0x64] sm:$0xf]
    %v148 = vld [vmem:[%s1 + $0x68] sm:$0xf]
    %v149 = vld [vmem:[%s1 + $0x6c] sm:$0xf]
    %v150 = vld [vmem:[%s1 + $0x70] sm:$0xf]
    %v151 = vld [vmem:[%s1 + $0x74] sm:$0xf]
    %v152 = vld [vmem:[%s1 + $0x78] sm:$0xf]
    %v153 = vld [vmem:[%s1 + $0x7c] sm:$0xf]
    %v154 = vld [vmem:[%s1 + $0x80] sm:$0xf]
    %v155 = vld [vmem:[%s1 + $0x84] sm:$0xf]
    %v156 = vld [vmem:[%s1 + $0x88] sm:$0xf]
    %v157 = vld [vmem:[%s1 + $0x8c] sm:$0xf]
    %v158 = vld [vmem:[%s1 + $0x90] sm:$0xf]
    %v159 = vld [vmem:[%s1 + $0x94] sm:$0xf]
    %v160 = vld [vmem:[%s1 + $0x98] sm:$0xf]
    %v161 = vld [vmem:[%s1 + $0x9c] sm:$0xf]
    %v162 = vld [vmem:[%s1 + $0xa0] sm:$0xf]
    %v163 = vld [vmem:[%s1 + $0xa4] sm:$0xf]
    %v164 = vld [vmem:[%s1 + $0xa8] sm:$0xf]
    %v165 = vld [vmem:[%s1 + $0xac] sm:$0xf]
    %v166 = vld [vmem:[%s1 + $0xb0] sm:$0xf]
    %v167 = vld [vmem:[%s1 + $0xb4] sm:$0xf]
    %v168 = vld [vmem:[%s1 + $0xb8] sm:$0xf]
    %v169 = vld [vmem:[%s1 + $0xbc] sm:$0xf]
    %v170 = vld [vmem:[%s1 + $0xc0] sm:$0xf]
    %v171 = vld [vmem:[%s1 + $0xc4] sm:$0xf]
    %v172 = vld [vmem:[%s1 + $0xc8] sm:$0xf]
    %v173 = vld [vmem:[%s1 + $0xcc] sm:$0xf]
    %v174 = vld [vmem:[%s1 + $0xd0] sm:$0xf]
    %v175 = vld [vmem:[%s1 + $0xd4] sm:$0xf]
    %v176 = vld [vmem:[%s1 + $0xd8] sm:$0xf]
    %v177 = vld [vmem:[%s1 + $0xdc] sm:$0xf]
    %v178 = vld [vmem:[%s1 + $0xe0] sm:$0xf]
    %v179 = vld [vmem:[%s1 + $0xe4] sm:$0xf]
    %v180 = vld [vmem:[%s1 + $0xe8] sm:$0xf]
    %v181 = vld [vmem:[%s1 + $0xec] sm:$0xf]
    %v182 = vld [vmem:[%s1 + $0xf0] sm:$0xf]
    %v183 = vld [vmem:[%s1 + $0xf4] sm:$0xf]
    %v184 = vld [vmem:[%s1 + $0xf8] sm:$0xf]
    %v185 = vld [vmem:[%s1 + $0xfc] sm:$0xf]
    %v186 = vld [vmem:[%s1 + $0x100] sm:$0xf]
    %v187 = vld [vmem:[%s1 + $0x104] sm:$0xf]
    %v188 = vld [vmem:[%s1 + $0x108] sm:$0xf]
    %v189 = vld [vmem:[%s1 + $0x10c] sm:$0xf]
    %v190 = vld [vmem:[%s1 + $0x110] sm:$0xf]
    %v191 = vld [vmem:[%s1 + $0x114] sm:$0xf]
    %v192 = vld [vmem:[%s1 + $0x118] sm:$0xf]
    %v193 = vld [vmem:[%s1 + $0x11c] sm:$0xf]
    %v194 = vld [vmem:[%s1 + $0x120] sm:$0xf]
    %v195 = vld [vmem:[%s1 + $0x124] sm:$0xf]
    %v196 = vld [vmem:[%s1 + $0x128] sm:$0xf]
    %v197 = vld [vmem:[%s1 + $0x12c] sm:$0xf]
    %v198 = vld [vmem:[%s1 + $0x130] sm:$0xf]
    %v199 = vld [vmem:[%s1 + $0x134] sm:$0xf]
    %v200 = vld [vmem:[%s1 + $0x138] sm:$0xf]
    %v201 = vld [vmem:[%s1 + $0x13c] sm:$0xf]
    %v202 = vld [vmem:[%s1 + $0x140] sm:$0xf]
    %v203 = vld [vmem:[%s1 + $0x144] sm:$0xf]
    %v204 = vld [vmem:[%s1 + $0x148] sm:$0xf]
    %v205 = vld [vmem:[%s1 + $0x14c] sm:$0xf]
    %v206 = vld [vmem:[%s1 + $0x150] sm:$0xf]
    %v207 = vld [vmem:[%s1 + $0x154] sm:$0xf]
    %v208 = vld [vmem:[%s1 + $0x158] sm:$0xf]
    %v209 = vld [vmem:[%s1 + $0x15c] sm:$0xf]
    %v210 = vld [vmem:[%s1 + $0x160] sm:$0xf]
    %v211 = vld [vmem:[%s1 + $0x164] sm:$0xf]
    %v212 = vld [vmem:[%s1 + $0x168] sm:$0xf]
    %v213 = vld [vmem:[%s1 + $0x16c] sm:$0xf]
    %v214 = vld [vmem:[%s1 + $0x170] sm:$0xf]
    %v215 = vld [vmem:[%s1 + $0x174] sm:$0xf]
    %v216 = vld [vmem:[%s1 + $0x178] sm:$0xf]
    %v217 = vld [vmem:[%s1 + $0x17c] sm:$0xf]
    %v218 = vld [vmem:[%s1 + $0x180] sm:$0xf]
    %v219 = vld [vmem:[%s1 + $0x184] sm:$0xf]
    %v220 = vld [vmem:[%s1 + $0x188] sm:$0xf]
    %v221 = vld [vmem:[%s1 + $0x18c] sm:$0xf]
    %v222 = vld [vmem:[%s1 + $0x190] sm:$0xf]
    %v223 = vld [vmem:[%s1 + $0x194] sm:$0xf]
    %v224 = vld [vmem:[%s1 + $0x198] sm:$0xf]
    %v225 = vld [vmem:[%s1 + $0x19c] sm:$0xf]
    %v226 = vld [vmem:[%s1 + $0x1a0] sm:$0xf]
    %v227 = vld [vmem:[%s1 + $0x1a4] sm:$0xf]
    %v228 = vld [vmem:[%s1 + $0x1a8] sm:$0xf]
    %v229 = vld [vmem:[%s1 + $0x1ac] sm:$0xf]
    %v230 = vld [vmem:[%s1 + $0x1b0] sm:$0xf]
    %v231 = vld [vmem:[%s1 + $0x1b4] sm:$0xf]
    %v232 = vld [vmem:[%s1 + $0x1b8] sm:$0xf]
    %v233 = vld [vmem:[%s1 + $0x1bc] sm:$0xf]
    %v234 = vld [vmem:[%s1 + $0x1c0] sm:$0xf]
    %v235 = vld [vmem:[%s1 + $0x1c4] sm:$0xf]
    %v236 = vld [vmem:[%s1 + $0x1c8] sm:$0xf]
    %v237 = vld [vmem:[%s1 + $0x1cc] sm:$0xf]
    %v238 = vld [vmem:[%s1 + $0x1d0] sm:$0xf]
    %v239 = vld [vmem:[%s1 + $0x1d4] sm:$0xf]
    %v240 = vld [vmem:[%s1 + $0x1d8] sm:$0xf]
    %v241 = vld [vmem:[%s1 + $0x1dc] sm:$0xf]
    %v242 = vld [vmem:[%s1 + $0x1e0] sm:$0xf]
    %v243 = vld [vmem:[%s1 + $0x1e4] sm:$0xf]
    %v244 = vld [vmem:[%s1 + $0x1e8] sm:$0xf]
    %v245 = vld [vmem:[%s1 + $0x1ec] sm:$0xf]
    %v246 = vld [vmem:[%s1 + $0x1f0] sm:$0xf]
    %v247 = vld [vmem:[%s1 + $0x1f4] sm:$0xf]
    %v248 = vld [vmem:[%s1 + $0x1f8] sm:$0xf]
    %v249 = vld [vmem:[%s1 + $0x1fc] sm:$0xf]
    %v250 = vld [vmem:[%s2] sm:$0x1]
    %v252 = vlaneseq
    %v253 = vshrl.u32 %v252, 7
    %v254 = vsub.s32 0, %v253
    %v255 = vrot.slane %v250, %v254
    %v385 = vunpack.c.l.b16 %v122
    %v386 = vunpack.c.l.b16 %v123
    %v387 = vunpack.c.l.b16 %v124
    %v388 = vunpack.c.l.b16 %v125
    %v389 = vunpack.c.l.b16 %v126
    %v390 = vunpack.c.l.b16 %v127
    %v391 = vunpack.c.l.b16 %v128
    %v392 = vunpack.c.l.b16 %v129
    %v393 = vunpack.c.l.b16 %v130
    %v394 = vunpack.c.l.b16 %v131
    %v395 = vunpack.c.l.b16 %v132
    %v396 = vunpack.c.l.b16 %v133
    %v397 = vunpack.c.l.b16 %v134
    %v398 = vunpack.c.l.b16 %v135
    %v399 = vunpack.c.l.b16 %v136
    %v400 = vunpack.c.l.b16 %v137
    %v401 = vunpack.c.l.b16 %v138
    %v402 = vunpack.c.l.b16 %v139
    %v403 = vunpack.c.l.b16 %v140
    %v404 = vunpack.c.l.b16 %v141
    %v405 = vunpack.c.l.b16 %v142
    %v406 = vunpack.c.l.b16 %v143
    %v407 = vunpack.c.l.b16 %v144
    %v408 = vunpack.c.l.b16 %v145
    %v409 = vunpack.c.l.b16 %v146
    %v410 = vunpack.c.l.b16 %v147
    %v411 = vunpack.c.l.b16 %v148
    %v412 = vunpack.c.l.b16 %v149
    %v413 = vunpack.c.l.b16 %v150
    %v414 = vunpack.c.l.b16 %v151
    %v415 = vunpack.c.l.b16 %v152
    %v416 = vunpack.c.l.b16 %v153
    %v417 = vunpack.c.l.b16 %v154
    %v418 = vunpack.c.l.b16 %v155
    %v419 = vunpack.c.l.b16 %v156
    %v420 = vunpack.c.l.b16 %v157
    %v421 = vunpack.c.l.b16 %v158
    %v422 = vunpack.c.l.b16 %v159
    %v423 = vunpack.c.l.b16 %v160
    %v424 = vunpack.c.l.b16 %v161
    %v425 = vunpack.c.l.b16 %v162
    %v426 = vunpack.c.l.b16 %v163
    %v427 = vunpack.c.l.b16 %v164
    %v428 = vunpack.c.l.b16 %v165
    %v429 = vunpack.c.l.b16 %v166
    %v430 = vunpack.c.l.b16 %v167
    %v431 = vunpack.c.l.b16 %v168
    %v432 = vunpack.c.l.b16 %v169
    %v433 = vunpack.c.l.b16 %v170
    %v434 = vunpack.c.l.b16 %v171
    %v435 = vunpack.c.l.b16 %v172
    %v436 = vunpack.c.l.b16 %v173
    %v437 = vunpack.c.l.b16 %v174
    %v438 = vunpack.c.l.b16 %v175
    %v439 = vunpack.c.l.b16 %v176
    %v440 = vunpack.c.l.b16 %v177
    %v441 = vunpack.c.l.b16 %v178
    %v442 = vunpack.c.l.b16 %v179
    %v443 = vunpack.c.l.b16 %v180
    %v444 = vunpack.c.l.b16 %v181
    %v445 = vunpack.c.l.b16 %v182
    %v446 = vunpack.c.l.b16 %v183
    %v447 = vunpack.c.l.b16 %v184
    %v448 = vunpack.c.l.b16 %v185
    %v449 = vunpack.c.l.b16 %v186
    %v450 = vunpack.c.l.b16 %v187
    %v451 = vunpack.c.l.b16 %v188
    %v452 = vunpack.c.l.b16 %v189
    %v453 = vunpack.c.l.b16 %v190
    %v454 = vunpack.c.l.b16 %v191
    %v455 = vunpack.c.l.b16 %v192
    %v456 = vunpack.c.l.b16 %v193
    %v457 = vunpack.c.l.b16 %v194
    %v458 = vunpack.c.l.b16 %v195
    %v459 = vunpack.c.l.b16 %v196
    %v460 = vunpack.c.l.b16 %v197
    %v461 = vunpack.c.l.b16 %v198
    %v462 = vunpack.c.l.b16 %v199
    %v463 = vunpack.c.l.b16 %v200
    %v464 = vunpack.c.l.b16 %v201
    %v465 = vunpack.c.l.b16 %v202
    %v466 = vunpack.c.l.b16 %v203
    %v467 = vunpack.c.l.b16 %v204
    %v468 = vunpack.c.l.b16 %v205
    %v469 = vunpack.c.l.b16 %v206
    %v470 = vunpack.c.l.b16 %v207
    %v471 = vunpack.c.l.b16 %v208
    %v472 = vunpack.c.l.b16 %v209
    %v473 = vunpack.c.l.b16 %v210
    %v474 = vunpack.c.l.b16 %v211
    %v475 = vunpack.c.l.b16 %v212
    %v476 = vunpack.c.l.b16 %v213
    %v477 = vunpack.c.l.b16 %v214
    %v478 = vunpack.c.l.b16 %v215
    %v479 = vunpack.c.l.b16 %v216
    %v480 = vunpack.c.l.b16 %v217
    %v481 = vunpack.c.l.b16 %v218
    %v482 = vunpack.c.l.b16 %v219
    %v483 = vunpack.c.l.b16 %v220
    %v484 = vunpack.c.l.b16 %v221
    %v485 = vunpack.c.l.b16 %v222
    %v486 = vunpack.c.l.b16 %v223
    %v487 = vunpack.c.l.b16 %v224
    %v488 = vunpack.c.l.b16 %v225
    %v489 = vunpack.c.l.b16 %v226
    %v490 = vunpack.c.l.b16 %v227
    %v491 = vunpack.c.l.b16 %v228
    %v492 = vunpack.c.l.b16 %v229
    %v493 = vunpack.c.l.b16 %v230
    %v494 = vunpack.c.l.b16 %v231
    %v495 = vunpack.c.l.b16 %v232
    %v496 = vunpack.c.l.b16 %v233
    %v497 = vunpack.c.l.b16 %v234
    %v498 = vunpack.c.l.b16 %v235
    %v499 = vunpack.c.l.b16 %v236
    %v500 = vunpack.c.l.b16 %v237
    %v501 = vunpack.c.l.b16 %v238
    %v502 = vunpack.c.l.b16 %v239
    %v503 = vunpack.c.l.b16 %v240
    %v504 = vunpack.c.l.b16 %v241
    %v505 = vunpack.c.l.b16 %v242
    %v506 = vunpack.c.l.b16 %v243
    %v507 = vunpack.c.l.b16 %v244
    %v508 = vunpack.c.l.b16 %v245
    %v509 = vunpack.c.l.b16 %v246
    %v510 = vunpack.c.l.b16 %v247
    %v511 = vunpack.c.l.b16 %v248
    %v512 = vunpack.c.l.b16 %v249
    %v513 = vpack.c.b16 %v386, %v385
    %v514 = vpack.c.b16 %v388, %v387
    %v515 = vpack.c.b16 %v390, %v389
    %v516 = vpack.c.b16 %v392, %v391
    %v517 = vpack.c.b16 %v394, %v393
    %v518 = vpack.c.b16 %v396, %v395
    %v519 = vpack.c.b16 %v398, %v397
    %v520 = vpack.c.b16 %v400, %v399
    %v521 = vpack.c.b16 %v402, %v401
    %v522 = vpack.c.b16 %v404, %v403
    %v523 = vpack.c.b16 %v406, %v405
    %v524 = vpack.c.b16 %v408, %v407
    %v525 = vpack.c.b16 %v410, %v409
    %v526 = vpack.c.b16 %v412, %v411
    %v527 = vpack.c.b16 %v414, %v413
    %v528 = vpack.c.b16 %v416, %v415
    %v529 = vpack.c.b16 %v418, %v417
    %v530 = vpack.c.b16 %v420, %v419
    %v531 = vpack.c.b16 %v422, %v421
    %v532 = vpack.c.b16 %v424, %v423
    %v533 = vpack.c.b16 %v426, %v425
    %v534 = vpack.c.b16 %v428, %v427
    %v535 = vpack.c.b16 %v430, %v429
    %v536 = vpack.c.b16 %v432, %v431
    %v537 = vpack.c.b16 %v434, %v433
    %v538 = vpack.c.b16 %v436, %v435
    %v539 = vpack.c.b16 %v438, %v437
    %v540 = vpack.c.b16 %v440, %v439
    %v541 = vpack.c.b16 %v442, %v441
    %v542 = vpack.c.b16 %v444, %v443
    %v543 = vpack.c.b16 %v446, %v445
    %v544 = vpack.c.b16 %v448, %v447
    %v545 = vpack.c.b16 %v450, %v449
    %v546 = vpack.c.b16 %v452, %v451
    %v547 = vpack.c.b16 %v454, %v453
    %v548 = vpack.c.b16 %v456, %v455
    %v549 = vpack.c.b16 %v458, %v457
    %v550 = vpack.c.b16 %v460, %v459
    %v551 = vpack.c.b16 %v462, %v461
    %v552 = vpack.c.b16 %v464, %v463
    %v553 = vpack.c.b16 %v466, %v465
    %v554 = vpack.c.b16 %v468, %v467
    %v555 = vpack.c.b16 %v470, %v469
    %v556 = vpack.c.b16 %v472, %v471
    %v557 = vpack.c.b16 %v474, %v473
    %v558 = vpack.c.b16 %v476, %v475
    %v559 = vpack.c.b16 %v478, %v477
    %v560 = vpack.c.b16 %v480, %v479
    %v561 = vpack.c.b16 %v482, %v481
    %v562 = vpack.c.b16 %v484, %v483
    %v563 = vpack.c.b16 %v486, %v485
    %v564 = vpack.c.b16 %v488, %v487
    %v565 = vpack.c.b16 %v490, %v489
    %v566 = vpack.c.b16 %v492, %v491
    %v567 = vpack.c.b16 %v494, %v493
    %v568 = vpack.c.b16 %v496, %v495
    %v569 = vpack.c.b16 %v498, %v497
    %v570 = vpack.c.b16 %v500, %v499
    %v571 = vpack.c.b16 %v502, %v501
    %v572 = vpack.c.b16 %v504, %v503
    %v573 = vpack.c.b16 %v506, %v505
    %v574 = vpack.c.b16 %v508, %v507
    %v575 = vpack.c.b16 %v510, %v509
    %v576 = vpack.c.b16 %v512, %v511
    %641 = vmatprep.subr.bf16.mxu0 0
    %642 = vmatpush1.bf16.msra.mxu0 %v520
    %643 = vmatprep.subr.bf16.mxu0 0
    %644 = vmatpush1.bf16.msra.mxu0 %v519
    %645 = vmatprep.subr.bf16.mxu0 0
    %646 = vmatpush1.bf16.msra.mxu0 %v518
    %647 = vmatprep.subr.bf16.mxu0 0
    %648 = vmatpush1.bf16.msra.mxu0 %v517
    %649 = vmatprep.subr.bf16.mxu0 0
    %650 = vmatpush1.bf16.msra.mxu0 %v516
    %651 = vmatprep.subr.bf16.mxu0 0
    %652 = vmatpush1.bf16.msra.mxu0 %v515
    %653 = vmatprep.subr.bf16.mxu0 0
    %654 = vmatpush1.bf16.msra.mxu0 %v514
    %655 = vmatprep.subr.bf16.mxu0 0
    %656 = vmatpush1.bf16.msra.mxu0 %v513
    %657 = vmatprep.subr.bf16.mxu0 0
    %658 = vmatpush2.bf16.msra.mxu0 %v528
    %659 = vmatprep.subr.bf16.mxu0 0
    %660 = vmatpush2.bf16.msra.mxu0 %v527
    %661 = vmatprep.subr.bf16.mxu0 0
    %662 = vmatpush2.bf16.msra.mxu0 %v526
    %663 = vmatprep.subr.bf16.mxu0 0
    %664 = vmatpush2.bf16.msra.mxu0 %v525
    %665 = vmatprep.subr.bf16.mxu0 0
    %666 = vmatpush2.bf16.msra.mxu0 %v524
    %667 = vmatprep.subr.bf16.mxu0 0
    %668 = vmatpush2.bf16.msra.mxu0 %v523
    %669 = vmatprep.subr.bf16.mxu0 0
    %670 = vmatpush2.bf16.msra.mxu0 %v522
    %671 = vmatprep.subr.bf16.mxu0 0
    %672 = vmatpush2.bf16.msra.mxu0 %v521
    %673 = vmatprep.mubr.bf16.mxu0 %v115
    %674 = vmatmul.mubr.bf16.gmra.mxu0 %v114
    %v675 = vpop.f32.mrf.mxu0
    %v676 = vadd.f32 %v255, %v675
    %v677 = vpop.f32.mrf.mxu0
    %v678 = vpop.f32.mrf.mxu0
    %v679 = vpop.f32.mrf.mxu0
    %680 = vdwg.mxu0
    %681 = vmatprep.subr.bf16.mxu0 0
    %682 = vmatpush1.bf16.msra.mxu0 %v536
    %683 = vmatprep.subr.bf16.mxu0 0
    %684 = vmatpush1.bf16.msra.mxu0 %v535
    %685 = vmatprep.subr.bf16.mxu0 0
    %686 = vmatpush1.bf16.msra.mxu0 %v534
    %687 = vmatprep.subr.bf16.mxu0 0
    %688 = vmatpush1.bf16.msra.mxu0 %v533
    %689 = vmatprep.subr.bf16.mxu0 0
    %690 = vmatpush1.bf16.msra.mxu0 %v532
    %691 = vmatprep.subr.bf16.mxu0 0
    %692 = vmatpush1.bf16.msra.mxu0 %v531
    %693 = vmatprep.subr.bf16.mxu0 0
    %694 = vmatpush1.bf16.msra.mxu0 %v530
    %695 = vmatprep.subr.bf16.mxu0 0
    %696 = vmatpush1.bf16.msra.mxu0 %v529
    %697 = vmatprep.subr.bf16.mxu0 0
    %698 = vmatpush2.bf16.msra.mxu0 %v544
    %699 = vmatprep.subr.bf16.mxu0 0
    %700 = vmatpush2.bf16.msra.mxu0 %v543
    %701 = vmatprep.subr.bf16.mxu0 0
    %702 = vmatpush2.bf16.msra.mxu0 %v542
    %703 = vmatprep.subr.bf16.mxu0 0
    %704 = vmatpush2.bf16.msra.mxu0 %v541
    %705 = vmatprep.subr.bf16.mxu0 0
    %706 = vmatpush2.bf16.msra.mxu0 %v540
    %707 = vmatprep.subr.bf16.mxu0 0
    %708 = vmatpush2.bf16.msra.mxu0 %v539
    %709 = vmatprep.subr.bf16.mxu0 0
    %710 = vmatpush2.bf16.msra.mxu0 %v538
    %711 = vmatprep.subr.bf16.mxu0 0
    %712 = vmatpush2.bf16.msra.mxu0 %v537
    %713 = vmatprep.mubr.bf16.mxu0 %v117
    %714 = vmatmul.mubr.bf16.gmra.mxu0 %v116
    %v715 = vpop.f32.mrf.mxu0
    %v716 = vadd.f32 %v676, %v715
    %v717 = vpop.f32.mrf.mxu0
    %v718 = vpop.f32.mrf.mxu0
    %v719 = vpop.f32.mrf.mxu0
    %720 = vdwg.mxu0
    %721 = vmatprep.subr.bf16.mxu0 0
    %722 = vmatpush1.bf16.msra.mxu0 %v552
    %723 = vmatprep.subr.bf16.mxu0 0
    %724 = vmatpush1.bf16.msra.mxu0 %v551
    %725 = vmatprep.subr.bf16.mxu0 0
    %726 = vmatpush1.bf16.msra.mxu0 %v550
    %727 = vmatprep.subr.bf16.mxu0 0
    %728 = vmatpush1.bf16.msra.mxu0 %v549
    %729 = vmatprep.subr.bf16.mxu0 0
    %730 = vmatpush1.bf16.msra.mxu0 %v548
    %731 = vmatprep.subr.bf16.mxu0 0
    %732 = vmatpush1.bf16.msra.mxu0 %v547
    %733 = vmatprep.subr.bf16.mxu0 0
    %734 = vmatpush1.bf16.msra.mxu0 %v546
    %735 = vmatprep.subr.bf16.mxu0 0
    %736 = vmatpush1.bf16.msra.mxu0 %v545
    %737 = vmatprep.subr.bf16.mxu0 0
    %738 = vmatpush2.bf16.msra.mxu0 %v560
    %739 = vmatprep.subr.bf16.mxu0 0
    %740 = vmatpush2.bf16.msra.mxu0 %v559
    %741 = vmatprep.subr.bf16.mxu0 0
    %742 = vmatpush2.bf16.msra.mxu0 %v558
    %743 = vmatprep.subr.bf16.mxu0 0
    %744 = vmatpush2.bf16.msra.mxu0 %v557
    %745 = vmatprep.subr.bf16.mxu0 0
    %746 = vmatpush2.bf16.msra.mxu0 %v556
    %747 = vmatprep.subr.bf16.mxu0 0
    %748 = vmatpush2.bf16.msra.mxu0 %v555
    %749 = vmatprep.subr.bf16.mxu0 0
    %750 = vmatpush2.bf16.msra.mxu0 %v554
    %751 = vmatprep.subr.bf16.mxu0 0
    %752 = vmatpush2.bf16.msra.mxu0 %v553
    %753 = vmatprep.mubr.bf16.mxu0 %v119
    %754 = vmatmul.mubr.bf16.gmra.mxu0 %v118
    %v755 = vpop.f32.mrf.mxu0
    %v756 = vadd.f32 %v716, %v755
    %v757 = vpop.f32.mrf.mxu0
    %v758 = vpop.f32.mrf.mxu0
    %v759 = vpop.f32.mrf.mxu0
    %760 = vdwg.mxu0
    %761 = vmatprep.subr.bf16.mxu0 0
    %762 = vmatpush1.bf16.msra.mxu0 %v568
    %763 = vmatprep.subr.bf16.mxu0 0
    %764 = vmatpush1.bf16.msra.mxu0 %v567
    %765 = vmatprep.subr.bf16.mxu0 0
    %766 = vmatpush1.bf16.msra.mxu0 %v566
    %767 = vmatprep.subr.bf16.mxu0 0
    %768 = vmatpush1.bf16.msra.mxu0 %v565
    %769 = vmatprep.subr.bf16.mxu0 0
    %770 = vmatpush1.bf16.msra.mxu0 %v564
    %771 = vmatprep.subr.bf16.mxu0 0
    %772 = vmatpush1.bf16.msra.mxu0 %v563
    %773 = vmatprep.subr.bf16.mxu0 0
    %774 = vmatpush1.bf16.msra.mxu0 %v562
    %775 = vmatprep.subr.bf16.mxu0 0
    %776 = vmatpush1.bf16.msra.mxu0 %v561
    %777 = vmatprep.subr.bf16.mxu0 0
    %778 = vmatpush2.bf16.msra.mxu0 %v576
    %779 = vmatprep.subr.bf16.mxu0 0
    %780 = vmatpush2.bf16.msra.mxu0 %v575
    %781 = vmatprep.subr.bf16.mxu0 0
    %782 = vmatpush2.bf16.msra.mxu0 %v574
    %783 = vmatprep.subr.bf16.mxu0 0
    %784 = vmatpush2.bf16.msra.mxu0 %v573
    %785 = vmatprep.subr.bf16.mxu0 0
    %786 = vmatpush2.bf16.msra.mxu0 %v572
    %787 = vmatprep.subr.bf16.mxu0 0
    %788 = vmatpush2.bf16.msra.mxu0 %v571
    %789 = vmatprep.subr.bf16.mxu0 0
    %790 = vmatpush2.bf16.msra.mxu0 %v570
    %791 = vmatprep.subr.bf16.mxu0 0
    %792 = vmatpush2.bf16.msra.mxu0 %v569
    %793 = vmatprep.mubr.bf16.mxu0 %v121
    %794 = vmatmul.mubr.bf16.gmra.mxu0 %v120
    %v795 = vpop.f32.mrf.mxu0
    %v796 = vadd.f32 %v756, %v795
    %v797 = vpop.f32.mrf.mxu0
    %v798 = vpop.f32.mrf.mxu0
    %v799 = vpop.f32.mrf.mxu0
    %800 = vdwg.mxu0
    %vm801 = vcmask 130048
    %v802 = vsel %vm801, %v796, -inf
    %803 = vmax.xlane.f32.xlu0 %v802
    %v804 = vpop.xlane.xlu0 %803
    %v805 = vsub.f32 %v796, %v804
    %v806 = vmul.f32 %v805, 1.442695
    %v807 = vpow.pop %v806
    %v808 = vsel %vm801, %v807, 0.0
    %809 = vadd.xlane.f32.xlu0 %v808
    %v810 = vpop.xlane.xlu0 %809
    %v811 = vlog2.pop %v810
    %v812 = vmul.f32 %v811, 0.6931472
    %v813 = vlaneseq
    %v814 = vand.u32 %v813, 127
    %v815 = vld [vmem:[%s3] sm:$0xff]
    %816 = vset.pattern.permute.xlu0 0
    %817 = vperm.xlu0 %816, %v815
    %v818 = vpop.permute.xlu0 %817
    %vm819 = vcmp.eq.s32.totalorder %v814, %v818
    %v820 = vsel %vm819, %v805, 0.0
    %v821 = vsel %vm801, %v820, 0.0
    %822 = vadd.xlane.f32.xlu0 %v821
    %v823 = vpop.xlane.xlu0 %822
    %v824 = vsub.f32 %v812, %v823
    %v825 = vlaneseq
    %v826 = vshrl.u32 %v825, 7
    %s827 = smul.u32 0, 8
    %v828 = vstv %s827
    %v829 = vadd.s32 %v828, %v826
    %vm830 = vcmp.lt.s32.totalorder %v829, 2
    %v831 = vsel %vm830, %v824, 0.0
    %vm832 = vcmask 7168
    %833 = vst.msk [vmem:[#allocation2] sm:$0xff] %vm832, %v831
    // Predicated region
    $region18: #{tpu_custom_call.1} parent=1 // pred_check
      _
    $region19: #{tpu_custom_call.1} parent=1 // pred_check_branch
      %835 = sbr.rel (0) target = $region21
    $region20: #{tpu_custom_call.1} parent=1 // pred_region
      // Predicated region
      $region22: #{tpu_custom_call.1} parent=20 // pred_check
        _
      $region23: #{tpu_custom_call.1} parent=20 // pred_check_branch
        %837 = sbr.rel (0) target = $region25
      $region24: #{tpu_custom_call.1} parent=20 // pred_region
        // Predicated region
        $region26: #{tpu_custom_call.1} parent=24 // pred_check
          _
        $region27: #{tpu_custom_call.1} parent=24 // pred_check_branch
          %839 = sbr.rel target = $region29
        $region28: #{tpu_custom_call.1} parent=24 // pred_region
          // Predicated region
          $region41: #{tpu_custom_call.1} parent=28 // pred_check
            _
          $region42: #{tpu_custom_call.1} parent=28 // pred_check_branch
            %855 = sbr.rel (0) target = $region44
          $region43: #{tpu_custom_call.1} parent=28 // pred_region
            %s857 = ssub.s32 4, 1
            loop: start=0, step=1, limit=1
            $region45: #{tpu_custom_call.1} parent=43 // loop_pre_header
              _
            $region46: #{tpu_custom_call.1} parent=43 // loop_header
              %s859 = sphi 0, %s863
              %p860 = scmp.ge.s32.totalorder %s859, 1
              %s864 = sphi [#allocation2], [#allocation2]
              %s865 = sphi %s4, %s4
            $region47: #{tpu_custom_call.1} parent=43 // loop_header_branch
              %862 = sbr.rel (%p860) target = $region51
            $region48: #{tpu_custom_call.1} parent=43 // loop_body
              %v866 = vld [vmem:[%s864] sm:%s857]
              %867 = vst [vmem:[%s865] sm:%s857] %v866
            $region49: #{tpu_custom_call.1} parent=43 // loop_footer
              %s863 = sadd.s32 1, %s859
            $region50: #{tpu_custom_call.1} parent=43 // loop_footer_branch
              %858 = sbr.rel target = $region46
            $region51: #{tpu_custom_call.1} parent=43 // loop_exit
              _
          $region44: #{tpu_custom_call.1} parent=28 // pred_fallthru
            _
        $region29: #{tpu_custom_call.1} parent=24 // pred_fallthru
          _
        // Predicated region
        $region30: #{tpu_custom_call.1} parent=24 // pred_check
          _
        $region31: #{tpu_custom_call.1} parent=24 // pred_check_branch
          %841 = sbr.rel (0) target = $region33
        $region32: #{tpu_custom_call.1} parent=24 // pred_region
          %s843 = ssub.s32 4, 1
          loop: start=0, step=1, limit=1
          $region34: #{tpu_custom_call.1} parent=32 // loop_pre_header
            _
          $region35: #{tpu_custom_call.1} parent=32 // loop_header
            %s845 = sphi 0, %s849
            %p846 = scmp.ge.s32.totalorder %s845, 1
            %s850 = sphi [#allocation2], [#allocation2]
            %s851 = sphi %s4, %s4
          $region36: #{tpu_custom_call.1} parent=32 // loop_header_branch
            %848 = sbr.rel (%p846) target = $region40
          $region37: #{tpu_custom_call.1} parent=32 // loop_body
            %v852 = vld [vmem:[%s850] sm:%s843]
            %853 = vst [vmem:[%s851] sm:%s843] %v852
          $region38: #{tpu_custom_call.1} parent=32 // loop_footer
            %s849 = sadd.s32 1, %s845
          $region39: #{tpu_custom_call.1} parent=32 // loop_footer_branch
            %844 = sbr.rel target = $region35
          $region40: #{tpu_custom_call.1} parent=32 // loop_exit
            _
        $region33: #{tpu_custom_call.1} parent=24 // pred_fallthru
          _
      $region25: #{tpu_custom_call.1} parent=20 // pred_fallthru
        _
      %868 = vnop
    $region21: #{tpu_custom_call.1} parent=1 // pred_fallthru
      _
    // Predicated region
    $region52: #{tpu_custom_call.1} parent=1 // pred_check
      _
    $region53: #{tpu_custom_call.1} parent=1 // pred_check_branch
      %870 = sbr.rel (0) target = $region55
    $region54: #{tpu_custom_call.1} parent=1 // pred_region
      _
    $region55: #{tpu_custom_call.1} parent=1 // pred_fallthru
      _

</llo_original>
